<compile_context>
chip_gen: v7x
topology: tpu7x:2x2x1
jax: 0.10.0
libtpu: 0.0.40
codegen_flags: <defaults>
</compile_context>

<pallas_src>
import functools

import jax
import jax.numpy as jnp
from jax.experimental import pallas as pl
from jax.experimental.pallas import tpu as pltpu


def _round_up(x, m):
    return ((x + m - 1) // m) * m


def _center_intersection_kernel(emb_ref, w1_ref, b1_ref, w2_ref, b2_ref,
                                out_ref, *, use_bf16_mxu, n_valid):
    tb, n, d = emb_ref.shape
    emb3 = emb_ref[...]                            # (TB, N, D) f32
    emb2 = emb3.reshape(tb * n, d)                 # free relayout (N % 8 == 0, D % 128 == 0)

    # Weights arrive pre-transposed and pre-cast (bf16 if use_bf16_mxu) from the
    # wrapper, so the only per-step cast is on the activations.
    x = emb2.astype(jnp.bfloat16) if use_bf16_mxu else emb2
    w1 = w1_ref[...]
    w2 = w2_ref[...]

    # layer1 + ReLU  (MXU matmul, f32 accumulate)
    h = jnp.dot(x, w1, preferred_element_type=jnp.float32) + b1_ref[...]
    h = jnp.maximum(h, 0.0)                        # (TB*N, D) f32
    if use_bf16_mxu:
        h = h.astype(jnp.bfloat16)

    # layer2 -> attention logits
    logits = jnp.dot(h, w2, preferred_element_type=jnp.float32) + b2_ref[...]
    logits = logits.reshape(tb, n, d)              # (TB, N, D)

    if n_valid < n:
        # Static branch: only emitted when the N axis was padded.  Padded set
        # members must not participate in the softmax.
        row = jax.lax.broadcasted_iota(jnp.int32, (tb, n, d), 1)
        logits = jnp.where(row < n_valid, logits, -jnp.inf)

    # Numerically-stable softmax over the N (set-of-embeddings) axis.
    m = jnp.max(logits, axis=1, keepdims=True)     # (TB, 1, D)
    e = jnp.exp(logits - m)                        # (TB, N, D)
    s = jnp.sum(e, axis=1, keepdims=True)          # (TB, 1, D)
    r = pl.reciprocal(s, approx=True)              # EUP vrcp (frees VALU slots)
    r = r * (2.0 - s * r)                          # one Newton step -> ~f32 accuracy
    att = e * r

    # Weighted sum over the N axis (f32; padded rows/cols contribute exact zeros).
    out_ref[...] = jnp.sum(att * emb3, axis=1)     # (TB, D)


@functools.partial(jax.jit,
                   static_argnames=("tb", "use_bf16_mxu", "vmem_limit_bytes"))
def center_intersection(embeddings, w1, b1, w2, b2, *, tb=None,
                        use_bf16_mxu=True, vmem_limit_bytes=None):
    """embeddings: (B, N, D) or (N, D) f32; w1/w2: (D, D) PyTorch layout (out, in);
    b1/b2: (D,).  Returns (B, D) (or (D,) for unbatched input)."""
    squeeze = embeddings.ndim == 2
    if squeeze:
        embeddings = embeddings[None]
    b, n, d = embeddings.shape

    # Lane/sublane-dense padding (static, wrapper-side layout plumbing).
    d_pad = _round_up(d, 128)
    n_pad = _round_up(n, 8)

    # Auto batch tile: fill the MXU M dimension (~256) without blowing a
    # conservative VMEM budget (sized for v5e's 16 MiB scoped default:
    # ~2 emb buffers + ~6 f32 intermediates of the same tile).
    if tb is None:
        tb = max(1, pl.cdiv(256, n_pad))
        per_row_bytes = n_pad * d_pad * 4 * 8
        tb = max(1, min(tb, (12 * 1024 * 1024) // per_row_bytes))
    tb = max(1, min(tb, b))
    b_pad = _round_up(b, tb)

    # Zero-pad inputs.  Padded D columns and padded N/B rows provably produce
    # zeros in the sliced-off regions and do not perturb the real outputs.
    emb_p = jnp.pad(embeddings,
                    ((0, b_pad - b), (0, n_pad - n), (0, d_pad - d)))
    w1_p = jnp.pad(w1.T, ((0, d_pad - d), (0, d_pad - d)))   # (D_in, D_out)
    w2_p = jnp.pad(w2.T, ((0, d_pad - d), (0, d_pad - d)))
    b1_p = jnp.pad(b1, (0, d_pad - d)).reshape(1, d_pad)
    b2_p = jnp.pad(b2, (0, d_pad - d)).reshape(1, d_pad)

    if use_bf16_mxu:
        # Hoisted weight cast: done once here, not every grid step in-kernel.
        w1_p = w1_p.astype(jnp.bfloat16)
        w2_p = w2_p.astype(jnp.bfloat16)

    kernel = functools.partial(_center_intersection_kernel,
                               use_bf16_mxu=use_bf16_mxu, n_valid=n)

    out = pl.pallas_call(
        kernel,
        out_shape=jax.ShapeDtypeStruct((b_pad, d_pad), jnp.float32),
        grid=(b_pad // tb,),
        in_specs=[
            pl.BlockSpec((tb, n_pad, d_pad), lambda i: (i, 0, 0)),  # embeddings tile
            pl.BlockSpec((d_pad, d_pad), lambda i: (0, 0)),         # W1.T (VMEM-resident)
            pl.BlockSpec((1, d_pad), lambda i: (0, 0)),             # b1   (VMEM-resident)
            pl.BlockSpec((d_pad, d_pad), lambda i: (0, 0)),         # W2.T (VMEM-resident)
            pl.BlockSpec((1, d_pad), lambda i: (0, 0)),             # b2   (VMEM-resident)
        ],
        out_specs=pl.BlockSpec((tb, d_pad), lambda i: (i, 0)),
        compiler_params=pltpu.CompilerParams(
            dimension_semantics=("parallel",),
            vmem_limit_bytes=vmem_limit_bytes),
    )(emb_p, w1_p, b1_p, w2_p, b2_p)

    out = out[:b, :d]
    return out[0] if squeeze else out


def _xavier_uniform(key, shape, dtype=jnp.float32):
    fan_in, fan_out = shape[1], shape[0]
    limit = jnp.sqrt(6.0 / (fan_in + fan_out))
    return jax.random.uniform(key, shape, dtype, minval=-limit, maxval=limit)


def _linear_bias(key, dim, dtype=jnp.float32):
    # PyTorch nn.Linear default bias init: U(-1/sqrt(fan_in), 1/sqrt(fan_in))
    bound = 1.0 / jnp.sqrt(jnp.asarray(dim, dtype))
    return jax.random.uniform(key, (dim,), dtype, minval=-bound, maxval=bound)


def _reference(embeddings, w1, b1, w2, b2):
    h = jax.nn.relu(embeddings @ w1.T + b1)
    att = jax.nn.softmax(h @ w2.T + b2, axis=0)
    return jnp.sum(att * embeddings, axis=0)


if __name__ == "__main__":
    B, N, DIM = 16, 8, 32  # 16 queries, each intersecting 8 embeddings of dim 32

    key = jax.random.PRNGKey(0)
    k_emb, k_w1, k_b1, k_w2, k_b2, k_r = jax.random.split(key, 6)

    embeddings = jax.random.normal(k_emb, (B, N, DIM), jnp.float32)
    w1 = _xavier_uniform(k_w1, (DIM, DIM))
    b1 = _linear_bias(k_b1, DIM)
    w2 = _xavier_uniform(k_w2, (DIM, DIM))
    b2 = _linear_bias(k_b2, DIM)

    ref = jax.vmap(_reference, in_axes=(0, None, None, None, None))(
        embeddings, w1, b1, w2, b2)

    # Primary path: bf16 MXU inputs (default), f32 softmax / weighted sum.
    out_bf16 = jax.block_until_ready(
        center_intersection(embeddings, w1, b1, w2, b2))
    assert out_bf16.shape == (B, DIM)
    assert jnp.allclose(out_bf16, ref, atol=1e-1, rtol=1e-1), \
        "bf16-MXU batched mismatch vs reference"

    # Strict-parity f32 path.
    out_f32 = jax.block_until_ready(
        center_intersection(embeddings, w1, b1, w2, b2, use_bf16_mxu=False))
    assert jnp.allclose(out_f32, ref, atol=1e-4, rtol=1e-4), \
        "f32 batched mismatch vs reference"

    # Ragged shapes: exercise B-, N- and D-padding plus the in-kernel N mask.
    Br, Nr, Dr = 5, 7, 20
    kr_e, kr_w1, kr_b1, kr_w2, kr_b2 = jax.random.split(k_r, 5)
    emb_r = jax.random.normal(kr_e, (Br, Nr, Dr), jnp.float32)
    w1_r = _xavier_uniform(kr_w1, (Dr, Dr)); b1_r = _linear_bias(kr_b1, Dr)
    w2_r = _xavier_uniform(kr_w2, (Dr, Dr)); b2_r = _linear_bias(kr_b2, Dr)
    out_r = jax.block_until_ready(
        center_intersection(emb_r, w1_r, b1_r, w2_r, b2_r, use_bf16_mxu=False))
    ref_r = jax.vmap(_reference, in_axes=(0, None, None, None, None))(
        emb_r, w1_r, b1_r, w2_r, b2_r)
    assert out_r.shape == (Br, Dr)
    assert jnp.allclose(out_r, ref_r, atol=1e-4, rtol=1e-4), \
        "ragged-shape mismatch vs reference"

    # Unbatched path keeps the original module interface.
    out1 = jax.block_until_ready(
        center_intersection(embeddings[0], w1, b1, w2, b2, use_bf16_mxu=False))
    assert out1.shape == (DIM,)
    assert jnp.allclose(out1, ref[0], atol=1e-4, rtol=1e-4), \
        "single-query mismatch"

    print("KERNEL_OK")
</pallas_src>

<mosaic_0001>
module attributes {stable_mosaic.version = 11 : i64} {
  func.func @_center_intersection_kernel(%arg0: i32, %arg1: memref<16x8x128xf32, #tpu.memory_space<vmem>>, %arg2: memref<128x128xbf16, #tpu.memory_space<vmem>>, %arg3: memref<1x128xf32, #tpu.memory_space<vmem>>, %arg4: memref<128x128xbf16, #tpu.memory_space<vmem>>, %arg5: memref<1x128xf32, #tpu.memory_space<vmem>>, %arg6: memref<16x128xf32, #tpu.memory_space<vmem>>) attributes {dimension_semantics = [#tpu.dimension_semantics<parallel>], iteration_bounds = array<i64: 1>, scalar_prefetch = 0 : i64, scratch_operands = 0 : i64, tpu.core_type = #tpu.core_type<tc>, window_params = [{transform_indices = @transform_0, window_bounds = array<i64: 16, 8, 128>}, {pipeline_mode = #tpu.pipeline_mode<synchronous>, transform_indices = @transform_1, window_bounds = array<i64: 128, 128>}, {pipeline_mode = #tpu.pipeline_mode<synchronous>, transform_indices = @transform_2, window_bounds = array<i64: 1, 128>}, {pipeline_mode = #tpu.pipeline_mode<synchronous>, transform_indices = @transform_3, window_bounds = array<i64: 128, 128>}, {pipeline_mode = #tpu.pipeline_mode<synchronous>, transform_indices = @transform_4, window_bounds = array<i64: 1, 128>}, {transform_indices = @transform_5, window_bounds = array<i64: 16, 128>}]} {
    %c0 = arith.constant 0 : index
    %c0_0 = arith.constant 0 : index
    %c0_1 = arith.constant 0 : index
    %0 = vector.load %arg1[%c0, %c0_0, %c0_1] : memref<16x8x128xf32, #tpu.memory_space<vmem>>, vector<16x8x128xf32>
    %1 = vector.shape_cast %0 : vector<16x8x128xf32> to vector<128x128xf32>
    %2 = arith.truncf %1 : vector<128x128xf32> to vector<128x128xbf16>
    %c0_2 = arith.constant 0 : index
    %c0_3 = arith.constant 0 : index
    %3 = vector.load %arg2[%c0_2, %c0_3] : memref<128x128xbf16, #tpu.memory_space<vmem>>, vector<128x128xbf16>
    %c0_4 = arith.constant 0 : index
    %c0_5 = arith.constant 0 : index
    %4 = vector.load %arg4[%c0_4, %c0_5] : memref<128x128xbf16, #tpu.memory_space<vmem>>, vector<128x128xbf16>
    %cst = arith.constant dense<0.000000e+00> : vector<128x128xf32>
    %5 = tpu.matmul %2, %3, %cst {dimension_numbers = #tpu.dot_dimension_numbers<[1], [0], [0], [1], [0, 0, 1, 1], [], []>} : vector<128x128xbf16>, vector<128x128xbf16>, vector<128x128xf32> -> vector<128x128xf32>
    %c0_6 = arith.constant 0 : index
    %c0_7 = arith.constant 0 : index
    %6 = vector.load %arg3[%c0_6, %c0_7] : memref<1x128xf32, #tpu.memory_space<vmem>>, vector<1x128xf32>
    %7 = vector.broadcast %6 : vector<1x128xf32> to vector<128x128xf32>
    %8 = arith.addf %5, %7 : vector<128x128xf32>
    %cst_8 = arith.constant 0.000000e+00 : f32
    %9 = vector.broadcast %cst_8 : f32 to vector<128x128xf32>
    %10 = arith.maximumf %8, %9 : vector<128x128xf32>
    %11 = arith.truncf %10 : vector<128x128xf32> to vector<128x128xbf16>
    %cst_9 = arith.constant dense<0.000000e+00> : vector<128x128xf32>
    %12 = tpu.matmul %11, %4, %cst_9 {dimension_numbers = #tpu.dot_dimension_numbers<[1], [0], [0], [1], [0, 0, 1, 1], [], []>} : vector<128x128xbf16>, vector<128x128xbf16>, vector<128x128xf32> -> vector<128x128xf32>
    %c0_10 = arith.constant 0 : index
    %c0_11 = arith.constant 0 : index
    %13 = vector.load %arg5[%c0_10, %c0_11] : memref<1x128xf32, #tpu.memory_space<vmem>>, vector<1x128xf32>
    %14 = vector.broadcast %13 : vector<1x128xf32> to vector<128x128xf32>
    %15 = arith.addf %12, %14 : vector<128x128xf32>
    %16 = vector.shape_cast %15 : vector<128x128xf32> to vector<16x8x128xf32>
    %cst_12 = arith.constant dense<0xFF800000> : vector<16x128xf32>
    %17 = vector.multi_reduction <maximumf>, %16, %cst_12 [1] : vector<16x8x128xf32> to vector<16x128xf32>
    %18 = vector.shape_cast %17 : vector<16x128xf32> to vector<16x1x128xf32>
    %19 = vector.broadcast %18 : vector<16x1x128xf32> to vector<16x8x128xf32>
    %20 = arith.subf %16, %19 : vector<16x8x128xf32>
    %21 = math.exp %20 : vector<16x8x128xf32>
    %cst_13 = arith.constant dense<0.000000e+00> : vector<16x128xf32>
    %22 = vector.multi_reduction <add>, %21, %cst_13 [1] : vector<16x8x128xf32> to vector<16x128xf32>
    %23 = vector.shape_cast %22 : vector<16x128xf32> to vector<16x1x128xf32>
    %24 = tpu.reciprocal %23 {approx = true} : vector<16x1x128xf32> -> vector<16x1x128xf32>
    %25 = arith.mulf %23, %24 : vector<16x1x128xf32>
    %cst_14 = arith.constant 2.000000e+00 : f32
    %26 = vector.broadcast %cst_14 : f32 to vector<16x1x128xf32>
    %27 = arith.subf %26, %25 : vector<16x1x128xf32>
    %28 = arith.mulf %24, %27 : vector<16x1x128xf32>
    %29 = vector.broadcast %28 : vector<16x1x128xf32> to vector<16x8x128xf32>
    %30 = arith.mulf %21, %29 : vector<16x8x128xf32>
    %31 = arith.mulf %30, %0 : vector<16x8x128xf32>
    %cst_15 = arith.constant dense<0.000000e+00> : vector<16x128xf32>
    %32 = vector.multi_reduction <add>, %31, %cst_15 [1] : vector<16x8x128xf32> to vector<16x128xf32>
    %c0_16 = arith.constant 0 : index
    %c0_17 = arith.constant 0 : index
    %33 = vector.load %arg6[%c0_16, %c0_17] : memref<16x128xf32, #tpu.memory_space<vmem>>, vector<16x128xf32>
    tpu.vector_store %arg6[%c0_16, %c0_17], %32 {strides = array<i32>} : memref<16x128xf32, #tpu.memory_space<vmem>>, vector<16x128xf32>,
    return
  }
  func.func @transform_0(%arg0: i32) -> (i32, i32, i32) {
    %c0_i32 = arith.constant 0 : i32
    %c0_i32_0 = arith.constant 0 : i32
    %c0_i32_1 = arith.constant 0 : i32
    return %arg0, %c0_i32, %c0_i32_0 : i32, i32, i32
  }
  func.func @transform_1(%arg0: i32) -> (i32, i32) {
    %c0_i32 = arith.constant 0 : i32
    %c0_i32_0 = arith.constant 0 : i32
    %c0_i32_1 = arith.constant 0 : i32
    return %c0_i32, %c0_i32_0 : i32, i32
  }
  func.func @transform_2(%arg0: i32) -> (i32, i32) {
    %c0_i32 = arith.constant 0 : i32
    %c0_i32_0 = arith.constant 0 : i32
    %c0_i32_1 = arith.constant 0 : i32
    return %c0_i32, %c0_i32_0 : i32, i32
  }
  func.func @transform_3(%arg0: i32) -> (i32, i32) {
    %c0_i32 = arith.constant 0 : i32
    %c0_i32_0 = arith.constant 0 : i32
    %c0_i32_1 = arith.constant 0 : i32
    return %c0_i32, %c0_i32_0 : i32, i32
  }
  func.func @transform_4(%arg0: i32) -> (i32, i32) {
    %c0_i32 = arith.constant 0 : i32
    %c0_i32_0 = arith.constant 0 : i32
    %c0_i32_1 = arith.constant 0 : i32
    return %c0_i32, %c0_i32_0 : i32, i32
  }
  func.func @transform_5(%arg0: i32) -> (i32, i32) {
    %c0_i32 = arith.constant 0 : i32
    %c0_i32_0 = arith.constant 0 : i32
    return %arg0, %c0_i32 : i32, i32
  }
}

</mosaic_0001>

<llo_original>
// kernel: center_intersection.1
$region0: #{center_intersection.1}
  #allocation0 [shape = 'u32[]', space=smem, size = 0x4, offset = 0x4, fixed_abs, tag = 'smem constant byte address 0x4 - core index']
  #allocation1 [shape = 'u32[144,128]{1,0:T(1,128)}', space=vmem, size = 0x12000, scoped, tag = 'internal scratch']
  %s0 = inlined_call_operand.vmem [shape: f32[16,8,128], index: 0, kind: input, shape index: {}]
  %s1 = inlined_call_operand.vmem [shape: bf16[128,128], index: 1, kind: input, shape index: {}]
  %s2 = inlined_call_operand.vmem [shape: f32[1,128], index: 2, kind: input, shape index: {}]
  %s3 = inlined_call_operand.vmem [shape: bf16[128,128], index: 3, kind: input, shape index: {}]
  %s4 = inlined_call_operand.vmem [shape: f32[1,128], index: 4, kind: input, shape index: {}]
  %s5 = inlined_call_operand.hbm [shape: f32[16,128], index: 5, kind: output, shape index: {}]
  %s6 = sld [smem:[#allocation0]]
  $region30: #{center_intersection.1} parent=0
    _
  %s8 = ssub.s32 1, %s6
  %s9 = scalar_select 0, %s8, %s6
  $region1: #{center_intersection.1} parent=0
    #allocation2 [shape = 'u8[8192]{0}', space=vmem, size = 0x2000, scoped, tag = 'output window, operand 0, single buffered']
    #allocation3 [shape = 's32[1]{0}', space=sflag, size = 0x4, scoped, tag = 'scoped memory for center_intersection.1']
    %10 = vsyncpa [#allocation3], 0
    // Predicated region
    $region2: #{center_intersection.1} parent=1 // pred_check
      _
    $region3: #{center_intersection.1} parent=1 // pred_check_branch
      %12 = sbr.rel (0) target = $region5
    $region4: #{center_intersection.1} parent=1 // pred_region
      _
    $region5: #{center_intersection.1} parent=1 // pred_fallthru
      _
    // Predicated region
    $region6: #{center_intersection.1} parent=1 // pred_check
      _
    $region7: #{center_intersection.1} parent=1 // pred_check_branch
      %14 = sbr.rel (0) target = $region9
    $region8: #{center_intersection.1} parent=1 // pred_region
      _
    $region9: #{center_intersection.1} parent=1 // pred_fallthru
      _
    // Predicated region
    $region10: #{center_intersection.1} parent=1 // pred_check
      _
    $region11: #{center_intersection.1} parent=1 // pred_check_branch
      %16 = sbr.rel (0) target = $region13
    $region12: #{center_intersection.1} parent=1 // pred_region
      _
    $region13: #{center_intersection.1} parent=1 // pred_fallthru
      _
    // Predicated region
    $region14: #{center_intersection.1} parent=1 // pred_check
      _
    $region15: #{center_intersection.1} parent=1 // pred_check_branch
      %18 = sbr.rel (0) target = $region17
    $region16: #{center_intersection.1} parent=1 // pred_region
      _
    $region17: #{center_intersection.1} parent=1 // pred_fallthru
      _
    // Predicated region
    $region18: #{center_intersection.1} parent=1 // pred_check
      _
    $region19: #{center_intersection.1} parent=1 // pred_check_branch
      %20 = sbr.rel (0) target = $region21
    $region20: #{center_intersection.1} parent=1 // pred_region
      _
    $region21: #{center_intersection.1} parent=1 // pred_fallthru
      _
    %v22 = vld [vmem:[%s0] sm:$0xff]
    %v23 = vld [vmem:[%s0 + $0x8] sm:$0xff]
    %v24 = vld [vmem:[%s0 + $0x10] sm:$0xff]
    %v25 = vld [vmem:[%s0 + $0x18] sm:$0xff]
    %v26 = vld [vmem:[%s0 + $0x20] sm:$0xff]
    %v27 = vld [vmem:[%s0 + $0x28] sm:$0xff]
    %v28 = vld [vmem:[%s0 + $0x30] sm:$0xff]
    %v29 = vld [vmem:[%s0 + $0x38] sm:$0xff]
    %v30 = vld [vmem:[%s0 + $0x40] sm:$0xff]
    %v31 = vld [vmem:[%s0 + $0x48] sm:$0xff]
    %v32 = vld [vmem:[%s0 + $0x50] sm:$0xff]
    %v33 = vld [vmem:[%s0 + $0x58] sm:$0xff]
    %v34 = vld [vmem:[%s0 + $0x60] sm:$0xff]
    %v35 = vld [vmem:[%s0 + $0x68] sm:$0xff]
    %v36 = vld [vmem:[%s0 + $0x70] sm:$0xff]
    %v37 = vld [vmem:[%s0 + $0x78] sm:$0xff]
    %v38 = vpack.c.bf16 %v23, %v22
    %v39 = vpack.c.bf16 %v25, %v24
    %v40 = vpack.c.bf16 %v27, %v26
    %v41 = vpack.c.bf16 %v29, %v28
    %v42 = vpack.c.bf16 %v31, %v30
    %v43 = vpack.c.bf16 %v33, %v32
    %v44 = vpack.c.bf16 %v35, %v34
    %v45 = vpack.c.bf16 %v37, %v36
    %v46 = vld [vmem:[%s1] sm:$0xf]
    %v47 = vld [vmem:[%s1 + $0x4] sm:$0xf]
    %v48 = vld [vmem:[%s1 + $0x8] sm:$0xf]
    %v49 = vld [vmem:[%s1 + $0xc] sm:$0xf]
    %v50 = vld [vmem:[%s1 + $0x10] sm:$0xf]
    %v51 = vld [vmem:[%s1 + $0x14] sm:$0xf]
    %v52 = vld [vmem:[%s1 + $0x18] sm:$0xf]
    %v53 = vld [vmem:[%s1 + $0x1c] sm:$0xf]
    %v54 = vld [vmem:[%s1 + $0x20] sm:$0xf]
    %v55 = vld [vmem:[%s1 + $0x24] sm:$0xf]
    %v56 = vld [vmem:[%s1 + $0x28] sm:$0xf]
    %v57 = vld [vmem:[%s1 + $0x2c] sm:$0xf]
    %v58 = vld [vmem:[%s1 + $0x30] sm:$0xf]
    %v59 = vld [vmem:[%s1 + $0x34] sm:$0xf]
    %v60 = vld [vmem:[%s1 + $0x38] sm:$0xf]
    %v61 = vld [vmem:[%s1 + $0x3c] sm:$0xf]
    %v62 = vld [vmem:[%s3] sm:$0xf]
    %v63 = vld [vmem:[%s3 + $0x4] sm:$0xf]
    %v64 = vld [vmem:[%s3 + $0x8] sm:$0xf]
    %v65 = vld [vmem:[%s3 + $0xc] sm:$0xf]
    %v66 = vld [vmem:[%s3 + $0x10] sm:$0xf]
    %v67 = vld [vmem:[%s3 + $0x14] sm:$0xf]
    %v68 = vld [vmem:[%s3 + $0x18] sm:$0xf]
    %v69 = vld [vmem:[%s3 + $0x1c] sm:$0xf]
    %v70 = vld [vmem:[%s3 + $0x20] sm:$0xf]
    %v71 = vld [vmem:[%s3 + $0x24] sm:$0xf]
    %v72 = vld [vmem:[%s3 + $0x28] sm:$0xf]
    %v73 = vld [vmem:[%s3 + $0x2c] sm:$0xf]
    %v74 = vld [vmem:[%s3 + $0x30] sm:$0xf]
    %v75 = vld [vmem:[%s3 + $0x34] sm:$0xf]
    %v76 = vld [vmem:[%s3 + $0x38] sm:$0xf]
    %v77 = vld [vmem:[%s3 + $0x3c] sm:$0xf]
    %v78 = vld [vmem:[%s2] sm:$0x1]
    %v80 = vlaneseq
    %v81 = vshrl.u32 %v80, 7
    %v82 = vsub.s32 0, %v81
    %v83 = vrot.slane %v78, %v82
    %v101 = vunpack.c.l.b16 %v46
    %v102 = vunpack.c.l.b16 %v47
    %v103 = vunpack.c.l.b16 %v48
    %v104 = vunpack.c.l.b16 %v49
    %v105 = vunpack.c.l.b16 %v50
    %v106 = vunpack.c.l.b16 %v51
    %v107 = vunpack.c.l.b16 %v52
    %v108 = vunpack.c.l.b16 %v53
    %v109 = vunpack.c.l.b16 %v54
    %v110 = vunpack.c.l.b16 %v55
    %v111 = vunpack.c.l.b16 %v56
    %v112 = vunpack.c.l.b16 %v57
    %v113 = vunpack.c.l.b16 %v58
    %v114 = vunpack.c.l.b16 %v59
    %v115 = vunpack.c.l.b16 %v60
    %v116 = vunpack.c.l.b16 %v61
    %v117 = vpack.c.b16 %v102, %v101
    %v118 = vpack.c.b16 %v104, %v103
    %v119 = vpack.c.b16 %v106, %v105
    %v120 = vpack.c.b16 %v108, %v107
    %v121 = vpack.c.b16 %v110, %v109
    %v122 = vpack.c.b16 %v112, %v111
    %v123 = vpack.c.b16 %v114, %v113
    %v124 = vpack.c.b16 %v116, %v115
    %133 = vmatprep.subr.bf16.mxu0 0
    %134 = vmatpush1.bf16.msra.mxu0 %v117
    %135 = vmatprep.subr.bf16.mxu0 0
    %136 = vmatpush1.bf16.msra.mxu0 %v118
    %137 = vmatprep.subr.bf16.mxu0 0
    %138 = vmatpush1.bf16.msra.mxu0 %v119
    %139 = vmatprep.subr.bf16.mxu0 0
    %140 = vmatpush1.bf16.msra.mxu0 %v120
    %141 = vmatprep.subr.bf16.mxu0 0
    %142 = vmatpush1.bf16.msra.mxu0 %v121
    %143 = vmatprep.subr.bf16.mxu0 0
    %144 = vmatpush1.bf16.msra.mxu0 %v122
    %145 = vmatprep.subr.bf16.mxu0 0
    %146 = vmatpush1.bf16.msra.mxu0 %v123
    %147 = vmatprep.subr.bf16.mxu0 0
    %148 = vmatpush1.bf16.msra.mxu0 %v124
    %149 = vmatprep.subr.bf16.mxu0 0
    %150 = vmatpush1.bf16.msra.mxu0 0
    %151 = vmatprep.subr.bf16.mxu0 0
    %152 = vmatpush1.bf16.msra.mxu0 0
    %153 = vmatprep.subr.bf16.mxu0 0
    %154 = vmatpush1.bf16.msra.mxu0 0
    %155 = vmatprep.subr.bf16.mxu0 0
    %156 = vmatpush1.bf16.msra.mxu0 0
    %157 = vmatprep.subr.bf16.mxu0 0
    %158 = vmatpush1.bf16.msra.mxu0 0
    %159 = vmatprep.subr.bf16.mxu0 0
    %160 = vmatpush1.bf16.msra.mxu0 0
    %161 = vmatprep.subr.bf16.mxu0 0
    %162 = vmatpush1.bf16.msra.mxu0 0
    %163 = vmatprep.subr.bf16.mxu0 0
    %164 = vmatpush1.bf16.msra.mxu0 0
    %165 = vmatprep.mubr.bf16.mxu0 0
    %166 = vmatmul.mubr.bf16.gmra.mrb[0].mxu0 %v38
    %v167 = vpop.f32.mrb[0].mxu0
    %v168 = vadd.f32 %v83, %v167
    %v169 = vpop.f32.mrb[0].mxu0
    %v170 = vpop.f32.mrb[0].mxu0
    %v171 = vadd.f32 %v83, %v170
    %v172 = vpop.f32.mrb[0].mxu0
    %173 = vmatprep.mubr.bf16.mxu0 0
    %174 = vmatmul.mubr.bf16.gmra.mrb[0].mxu0 %v39
    %v175 = vpop.f32.mrb[0].mxu0
    %v176 = vadd.f32 %v83, %v175
    %v177 = vpop.f32.mrb[0].mxu0
    %v178 = vpop.f32.mrb[0].mxu0
    %v179 = vadd.f32 %v83, %v178
    %v180 = vpop.f32.mrb[0].mxu0
    %181 = vmatprep.mubr.bf16.mxu0 0
    %182 = vmatmul.mubr.bf16.gmra.mrb[0].mxu0 %v40
    %v183 = vpop.f32.mrb[0].mxu0
    %v184 = vadd.f32 %v83, %v183
    %v185 = vpop.f32.mrb[0].mxu0
    %v186 = vpop.f32.mrb[0].mxu0
    %v187 = vadd.f32 %v83, %v186
    %v188 = vpop.f32.mrb[0].mxu0
    %189 = vmatprep.mubr.bf16.mxu0 0
    %190 = vmatmul.mubr.bf16.gmra.mrb[0].mxu0 %v41
    %v191 = vpop.f32.mrb[0].mxu0
    %v192 = vadd.f32 %v83, %v191
    %v193 = vpop.f32.mrb[0].mxu0
    %v194 = vpop.f32.mrb[0].mxu0
    %v195 = vadd.f32 %v83, %v194
    %v196 = vpop.f32.mrb[0].mxu0
    %197 = vmatprep.mubr.bf16.mxu0 0
    %198 = vmatmul.mubr.bf16.gmra.mrb[0].mxu0 %v42
    %v199 = vpop.f32.mrb[0].mxu0
    %v200 = vadd.f32 %v83, %v199
    %v201 = vpop.f32.mrb[0].mxu0
    %v202 = vpop.f32.mrb[0].mxu0
    %v203 = vadd.f32 %v83, %v202
    %v204 = vpop.f32.mrb[0].mxu0
    %205 = vmatprep.mubr.bf16.mxu0 0
    %206 = vmatmul.mubr.bf16.gmra.mrb[0].mxu0 %v43
    %v207 = vpop.f32.mrb[0].mxu0
    %v208 = vadd.f32 %v83, %v207
    %v209 = vpop.f32.mrb[0].mxu0
    %v210 = vpop.f32.mrb[0].mxu0
    %v211 = vadd.f32 %v83, %v210
    %v212 = vpop.f32.mrb[0].mxu0
    %213 = vmatprep.mubr.bf16.mxu0 0
    %214 = vmatmul.mubr.bf16.gmra.mrb[0].mxu0 %v44
    %v215 = vpop.f32.mrb[0].mxu0
    %v216 = vadd.f32 %v83, %v215
    %v217 = vpop.f32.mrb[0].mxu0
    %v218 = vpop.f32.mrb[0].mxu0
    %v219 = vadd.f32 %v83, %v218
    %v220 = vpop.f32.mrb[0].mxu0
    %221 = vmatprep.mubr.bf16.mxu0 0
    %222 = vmatmul.mubr.bf16.gmra.mrb[0].mxu0 %v45
    %v223 = vpop.f32.mrb[0].mxu0
    %v224 = vadd.f32 %v83, %v223
    %v225 = vpop.f32.mrb[0].mxu0
    %v226 = vpop.f32.mrb[0].mxu0
    %v227 = vadd.f32 %v83, %v226
    %v228 = vpop.f32.mrb[0].mxu0
    %229 = vdwg.mxu0
    %v230 = vmax.f32 %v168, 0.0
    %v231 = vmax.f32 %v171, 0.0
    %v232 = vmax.f32 %v176, 0.0
    %v233 = vmax.f32 %v179, 0.0
    %v234 = vmax.f32 %v184, 0.0
    %v235 = vmax.f32 %v187, 0.0
    %v236 = vmax.f32 %v192, 0.0
    %v237 = vmax.f32 %v195, 0.0
    %v238 = vmax.f32 %v200, 0.0
    %v239 = vmax.f32 %v203, 0.0
    %v240 = vmax.f32 %v208, 0.0
    %v241 = vmax.f32 %v211, 0.0
    %v242 = vmax.f32 %v216, 0.0
    %v243 = vmax.f32 %v219, 0.0
    %v244 = vmax.f32 %v224, 0.0
    %v245 = vmax.f32 %v227, 0.0
    %v246 = vpack.c.bf16 %v231, %v230
    %v247 = vpack.c.bf16 %v233, %v232
    %v248 = vpack.c.bf16 %v235, %v234
    %v249 = vpack.c.bf16 %v237, %v236
    %v250 = vpack.c.bf16 %v239, %v238
    %v251 = vpack.c.bf16 %v241, %v240
    %v252 = vpack.c.bf16 %v243, %v242
    %v253 = vpack.c.bf16 %v245, %v244
    %v254 = vld [vmem:[%s4] sm:$0x1]
    %v256 = vlaneseq
    %v257 = vshrl.u32 %v256, 7
    %v258 = vsub.s32 0, %v257
    %v259 = vrot.slane %v254, %v258
    %v277 = vunpack.c.l.b16 %v62
    %v278 = vunpack.c.l.b16 %v63
    %v279 = vunpack.c.l.b16 %v64
    %v280 = vunpack.c.l.b16 %v65
    %v281 = vunpack.c.l.b16 %v66
    %v282 = vunpack.c.l.b16 %v67
    %v283 = vunpack.c.l.b16 %v68
    %v284 = vunpack.c.l.b16 %v69
    %v285 = vunpack.c.l.b16 %v70
    %v286 = vunpack.c.l.b16 %v71
    %v287 = vunpack.c.l.b16 %v72
    %v288 = vunpack.c.l.b16 %v73
    %v289 = vunpack.c.l.b16 %v74
    %v290 = vunpack.c.l.b16 %v75
    %v291 = vunpack.c.l.b16 %v76
    %v292 = vunpack.c.l.b16 %v77
    %v293 = vpack.c.b16 %v278, %v277
    %v294 = vpack.c.b16 %v280, %v279
    %v295 = vpack.c.b16 %v282, %v281
    %v296 = vpack.c.b16 %v284, %v283
    %v297 = vpack.c.b16 %v286, %v285
    %v298 = vpack.c.b16 %v288, %v287
    %v299 = vpack.c.b16 %v290, %v289
    %v300 = vpack.c.b16 %v292, %v291
    %309 = vmatprep.subr.bf16.mxu0 0
    %310 = vmatpush1.bf16.msra.mxu0 %v293
    %311 = vmatprep.subr.bf16.mxu0 0
    %312 = vmatpush1.bf16.msra.mxu0 %v294
    %313 = vmatprep.subr.bf16.mxu0 0
    %314 = vmatpush1.bf16.msra.mxu0 %v295
    %315 = vmatprep.subr.bf16.mxu0 0
    %316 = vmatpush1.bf16.msra.mxu0 %v296
    %317 = vmatprep.subr.bf16.mxu0 0
    %318 = vmatpush1.bf16.msra.mxu0 %v297
    %319 = vmatprep.subr.bf16.mxu0 0
    %320 = vmatpush1.bf16.msra.mxu0 %v298
    %321 = vmatprep.subr.bf16.mxu0 0
    %322 = vmatpush1.bf16.msra.mxu0 %v299
    %323 = vmatprep.subr.bf16.mxu0 0
    %324 = vmatpush1.bf16.msra.mxu0 %v300
    %325 = vmatprep.subr.bf16.mxu0 0
    %326 = vmatpush1.bf16.msra.mxu0 0
    %327 = vmatprep.subr.bf16.mxu0 0
    %328 = vmatpush1.bf16.msra.mxu0 0
    %329 = vmatprep.subr.bf16.mxu0 0
    %330 = vmatpush1.bf16.msra.mxu0 0
    %331 = vmatprep.subr.bf16.mxu0 0
    %332 = vmatpush1.bf16.msra.mxu0 0
    %333 = vmatprep.subr.bf16.mxu0 0
    %334 = vmatpush1.bf16.msra.mxu0 0
    %335 = vmatprep.subr.bf16.mxu0 0
    %336 = vmatpush1.bf16.msra.mxu0 0
    %337 = vmatprep.subr.bf16.mxu0 0
    %338 = vmatpush1.bf16.msra.mxu0 0
    %339 = vmatprep.subr.bf16.mxu0 0
    %340 = vmatpush1.bf16.msra.mxu0 0
    %341 = vmatprep.mubr.bf16.mxu0 0
    %342 = vmatmul.mubr.bf16.gmra.mrb[0].mxu0 %v246
    %v343 = vpop.f32.mrb[0].mxu0
    %v344 = vadd.f32 %v259, %v343
    %v345 = vpop.f32.mrb[0].mxu0
    %v346 = vpop.f32.mrb[0].mxu0
    %v347 = vadd.f32 %v259, %v346
    %v348 = vpop.f32.mrb[0].mxu0
    %349 = vmatprep.mubr.bf16.mxu0 0
    %350 = vmatmul.mubr.bf16.gmra.mrb[0].mxu0 %v247
    %v351 = vpop.f32.mrb[0].mxu0
    %v352 = vadd.f32 %v259, %v351
    %v353 = vpop.f32.mrb[0].mxu0
    %v354 = vpop.f32.mrb[0].mxu0
    %v355 = vadd.f32 %v259, %v354
    %v356 = vpop.f32.mrb[0].mxu0
    %357 = vmatprep.mubr.bf16.mxu0 0
    %358 = vmatmul.mubr.bf16.gmra.mrb[0].mxu0 %v248
    %v359 = vpop.f32.mrb[0].mxu0
    %v360 = vadd.f32 %v259, %v359
    %v361 = vpop.f32.mrb[0].mxu0
    %v362 = vpop.f32.mrb[0].mxu0
    %v363 = vadd.f32 %v259, %v362
    %v364 = vpop.f32.mrb[0].mxu0
    %365 = vmatprep.mubr.bf16.mxu0 0
    %366 = vmatmul.mubr.bf16.gmra.mrb[0].mxu0 %v249
    %v367 = vpop.f32.mrb[0].mxu0
    %v368 = vadd.f32 %v259, %v367
    %v369 = vpop.f32.mrb[0].mxu0
    %v370 = vpop.f32.mrb[0].mxu0
    %v371 = vadd.f32 %v259, %v370
    %v372 = vpop.f32.mrb[0].mxu0
    %373 = vmatprep.mubr.bf16.mxu0 0
    %374 = vmatmul.mubr.bf16.gmra.mrb[0].mxu0 %v250
    %v375 = vpop.f32.mrb[0].mxu0
    %v376 = vadd.f32 %v259, %v375
    %v377 = vpop.f32.mrb[0].mxu0
    %v378 = vpop.f32.mrb[0].mxu0
    %v379 = vadd.f32 %v259, %v378
    %v380 = vpop.f32.mrb[0].mxu0
    %381 = vmatprep.mubr.bf16.mxu0 0
    %382 = vmatmul.mubr.bf16.gmra.mrb[0].mxu0 %v251
    %v383 = vpop.f32.mrb[0].mxu0
    %v384 = vadd.f32 %v259, %v383
    %v385 = vpop.f32.mrb[0].mxu0
    %v386 = vpop.f32.mrb[0].mxu0
    %v387 = vadd.f32 %v259, %v386
    %v388 = vpop.f32.mrb[0].mxu0
    %389 = vmatprep.mubr.bf16.mxu0 0
    %390 = vmatmul.mubr.bf16.gmra.mrb[0].mxu0 %v252
    %v391 = vpop.f32.mrb[0].mxu0
    %v392 = vadd.f32 %v259, %v391
    %v393 = vpop.f32.mrb[0].mxu0
    %v394 = vpop.f32.mrb[0].mxu0
    %v395 = vadd.f32 %v259, %v394
    %v396 = vpop.f32.mrb[0].mxu0
    %397 = vmatprep.mubr.bf16.mxu0 0
    %398 = vmatmul.mubr.bf16.gmra.mrb[0].mxu0 %v253
    %v399 = vpop.f32.mrb[0].mxu0
    %v400 = vadd.f32 %v259, %v399
    %v401 = vpop.f32.mrb[0].mxu0
    %v402 = vpop.f32.mrb[0].mxu0
    %v403 = vadd.f32 %v259, %v402
    %v404 = vpop.f32.mrb[0].mxu0
    %405 = vdwg.mxu0
    %v406 = vrot.slane %v344, 4
    %v407 = vmax.f32 %v344, %v406
    %v408 = vrot.slane %v407, 2
    %v409 = vmax.f32 %v407, %v408
    %v410 = vrot.slane %v409, 1
    %v411 = vmax.f32 %v409, %v410
    %v412 = vrot.slane %v347, 4
    %v413 = vmax.f32 %v347, %v412
    %v414 = vrot.slane %v413, 2
    %v415 = vmax.f32 %v413, %v414
    %v416 = vrot.slane %v415, 1
    %v417 = vmax.f32 %v415, %v416
    %v418 = vrot.slane %v352, 4
    %v419 = vmax.f32 %v352, %v418
    %v420 = vrot.slane %v419, 2
    %v421 = vmax.f32 %v419, %v420
    %v422 = vrot.slane %v421, 1
    %v423 = vmax.f32 %v421, %v422
    %v424 = vrot.slane %v355, 4
    %v425 = vmax.f32 %v355, %v424
    %v426 = vrot.slane %v425, 2
    %v427 = vmax.f32 %v425, %v426
    %v428 = vrot.slane %v427, 1
    %v429 = vmax.f32 %v427, %v428
    %v430 = vrot.slane %v360, 4
    %v431 = vmax.f32 %v360, %v430
    %v432 = vrot.slane %v431, 2
    %v433 = vmax.f32 %v431, %v432
    %v434 = vrot.slane %v433, 1
    %v435 = vmax.f32 %v433, %v434
    %v436 = vrot.slane %v363, 4
    %v437 = vmax.f32 %v363, %v436
    %v438 = vrot.slane %v437, 2
    %v439 = vmax.f32 %v437, %v438
    %v440 = vrot.slane %v439, 1
    %v441 = vmax.f32 %v439, %v440
    %v442 = vrot.slane %v368, 4
    %v443 = vmax.f32 %v368, %v442
    %v444 = vrot.slane %v443, 2
    %v445 = vmax.f32 %v443, %v444
    %v446 = vrot.slane %v445, 1
    %v447 = vmax.f32 %v445, %v446
    %v448 = vrot.slane %v371, 4
    %v449 = vmax.f32 %v371, %v448
    %v450 = vrot.slane %v449, 2
    %v451 = vmax.f32 %v449, %v450
    %v452 = vrot.slane %v451, 1
    %v453 = vmax.f32 %v451, %v452
    %v454 = vrot.slane %v376, 4
    %v455 = vmax.f32 %v376, %v454
    %v456 = vrot.slane %v455, 2
    %v457 = vmax.f32 %v455, %v456
    %v458 = vrot.slane %v457, 1
    %v459 = vmax.f32 %v457, %v458
    %v460 = vrot.slane %v379, 4
    %v461 = vmax.f32 %v379, %v460
    %v462 = vrot.slane %v461, 2
    %v463 = vmax.f32 %v461, %v462
    %v464 = vrot.slane %v463, 1
    %v465 = vmax.f32 %v463, %v464
    %v466 = vrot.slane %v384, 4
    %v467 = vmax.f32 %v384, %v466
    %v468 = vrot.slane %v467, 2
    %v469 = vmax.f32 %v467, %v468
    %v470 = vrot.slane %v469, 1
    %v471 = vmax.f32 %v469, %v470
    %v472 = vrot.slane %v387, 4
    %v473 = vmax.f32 %v387, %v472
    %v474 = vrot.slane %v473, 2
    %v475 = vmax.f32 %v473, %v474
    %v476 = vrot.slane %v475, 1
    %v477 = vmax.f32 %v475, %v476
    %v478 = vrot.slane %v392, 4
    %v479 = vmax.f32 %v392, %v478
    %v480 = vrot.slane %v479, 2
    %v481 = vmax.f32 %v479, %v480
    %v482 = vrot.slane %v481, 1
    %v483 = vmax.f32 %v481, %v482
    %v484 = vrot.slane %v395, 4
    %v485 = vmax.f32 %v395, %v484
    %v486 = vrot.slane %v485, 2
    %v487 = vmax.f32 %v485, %v486
    %v488 = vrot.slane %v487, 1
    %v489 = vmax.f32 %v487, %v488
    %v490 = vrot.slane %v400, 4
    %v491 = vmax.f32 %v400, %v490
    %v492 = vrot.slane %v491, 2
    %v493 = vmax.f32 %v491, %v492
    %v494 = vrot.slane %v493, 1
    %v495 = vmax.f32 %v493, %v494
    %v496 = vrot.slane %v403, 4
    %v497 = vmax.f32 %v403, %v496
    %v498 = vrot.slane %v497, 2
    %v499 = vmax.f32 %v497, %v498
    %v500 = vrot.slane %v499, 1
    %v501 = vmax.f32 %v499, %v500
    %v502 = vsub.f32 %v344, %v411
    %v503 = vsub.f32 %v347, %v417
    %v504 = vsub.f32 %v352, %v423
    %v505 = vsub.f32 %v355, %v429
    %v506 = vsub.f32 %v360, %v435
    %v507 = vsub.f32 %v363, %v441
    %v508 = vsub.f32 %v368, %v447
    %v509 = vsub.f32 %v371, %v453
    %v510 = vsub.f32 %v376, %v459
    %v511 = vsub.f32 %v379, %v465
    %v512 = vsub.f32 %v384, %v471
    %v513 = vsub.f32 %v387, %v477
    %v514 = vsub.f32 %v392, %v483
    %v515 = vsub.f32 %v395, %v489
    %v516 = vsub.f32 %v400, %v495
    %v517 = vsub.f32 %v403, %v501
    %v518 = vmul.f32 %v502, 1.442695
    %v519 = vpow.pop %v518
    %v520 = vmul.f32 %v503, 1.442695
    %v521 = vpow.pop %v520
    %v522 = vmul.f32 %v504, 1.442695
    %v523 = vpow.pop %v522
    %v524 = vmul.f32 %v505, 1.442695
    %v525 = vpow.pop %v524
    %v526 = vmul.f32 %v506, 1.442695
    %v527 = vpow.pop %v526
    %v528 = vmul.f32 %v507, 1.442695
    %v529 = vpow.pop %v528
    %v530 = vmul.f32 %v508, 1.442695
    %v531 = vpow.pop %v530
    %v532 = vmul.f32 %v509, 1.442695
    %v533 = vpow.pop %v532
    %v534 = vmul.f32 %v510, 1.442695
    %v535 = vpow.pop %v534
    %v536 = vmul.f32 %v511, 1.442695
    %v537 = vpow.pop %v536
    %v538 = vmul.f32 %v512, 1.442695
    %v539 = vpow.pop %v538
    %v540 = vmul.f32 %v513, 1.442695
    %v541 = vpow.pop %v540
    %v542 = vmul.f32 %v514, 1.442695
    %v543 = vpow.pop %v542
    %v544 = vmul.f32 %v515, 1.442695
    %v545 = vpow.pop %v544
    %v546 = vmul.f32 %v516, 1.442695
    %v547 = vpow.pop %v546
    %v548 = vmul.f32 %v517, 1.442695
    %v549 = vpow.pop %v548
    %v550 = vrot.slane %v519, 4
    %v551 = vadd.f32 %v519, %v550
    %v552 = vrot.slane %v551, 2
    %v553 = vadd.f32 %v551, %v552
    %v554 = vrot.slane %v553, 1
    %v555 = vadd.f32 %v553, %v554
    %v556 = vrot.slane %v521, 4
    %v557 = vadd.f32 %v521, %v556
    %v558 = vrot.slane %v557, 2
    %v559 = vadd.f32 %v557, %v558
    %v560 = vrot.slane %v559, 1
    %v561 = vadd.f32 %v559, %v560
    %v562 = vrot.slane %v523, 4
    %v563 = vadd.f32 %v523, %v562
    %v564 = vrot.slane %v563, 2
    %v565 = vadd.f32 %v563, %v564
    %v566 = vrot.slane %v565, 1
    %v567 = vadd.f32 %v565, %v566
    %v568 = vrot.slane %v525, 4
    %v569 = vadd.f32 %v525, %v568
    %v570 = vrot.slane %v569, 2
    %v571 = vadd.f32 %v569, %v570
    %v572 = vrot.slane %v571, 1
    %v573 = vadd.f32 %v571, %v572
    %v574 = vrot.slane %v527, 4
    %v575 = vadd.f32 %v527, %v574
    %v576 = vrot.slane %v575, 2
    %v577 = vadd.f32 %v575, %v576
    %v578 = vrot.slane %v577, 1
    %v579 = vadd.f32 %v577, %v578
    %v580 = vrot.slane %v529, 4
    %v581 = vadd.f32 %v529, %v580
    %v582 = vrot.slane %v581, 2
    %v583 = vadd.f32 %v581, %v582
    %v584 = vrot.slane %v583, 1
    %v585 = vadd.f32 %v583, %v584
    %v586 = vrot.slane %v531, 4
    %v587 = vadd.f32 %v531, %v586
    %v588 = vrot.slane %v587, 2
    %v589 = vadd.f32 %v587, %v588
    %v590 = vrot.slane %v589, 1
    %v591 = vadd.f32 %v589, %v590
    %v592 = vrot.slane %v533, 4
    %v593 = vadd.f32 %v533, %v592
    %v594 = vrot.slane %v593, 2
    %v595 = vadd.f32 %v593, %v594
    %v596 = vrot.slane %v595, 1
    %v597 = vadd.f32 %v595, %v596
    %v598 = vrot.slane %v535, 4
    %v599 = vadd.f32 %v535, %v598
    %v600 = vrot.slane %v599, 2
    %v601 = vadd.f32 %v599, %v600
    %v602 = vrot.slane %v601, 1
    %v603 = vadd.f32 %v601, %v602
    %v604 = vrot.slane %v537, 4
    %v605 = vadd.f32 %v537, %v604
    %v606 = vrot.slane %v605, 2
    %v607 = vadd.f32 %v605, %v606
    %v608 = vrot.slane %v607, 1
    %v609 = vadd.f32 %v607, %v608
    %v610 = vrot.slane %v539, 4
    %v611 = vadd.f32 %v539, %v610
    %v612 = vrot.slane %v611, 2
    %v613 = vadd.f32 %v611, %v612
    %v614 = vrot.slane %v613, 1
    %v615 = vadd.f32 %v613, %v614
    %v616 = vrot.slane %v541, 4
    %v617 = vadd.f32 %v541, %v616
    %v618 = vrot.slane %v617, 2
    %v619 = vadd.f32 %v617, %v618
    %v620 = vrot.slane %v619, 1
    %v621 = vadd.f32 %v619, %v620
    %v622 = vrot.slane %v543, 4
    %v623 = vadd.f32 %v543, %v622
    %v624 = vrot.slane %v623, 2
    %v625 = vadd.f32 %v623, %v624
    %v626 = vrot.slane %v625, 1
    %v627 = vadd.f32 %v625, %v626
    %v628 = vrot.slane %v545, 4
    %v629 = vadd.f32 %v545, %v628
    %v630 = vrot.slane %v629, 2
    %v631 = vadd.f32 %v629, %v630
    %v632 = vrot.slane %v631, 1
    %v633 = vadd.f32 %v631, %v632
    %v634 = vrot.slane %v547, 4
    %v635 = vadd.f32 %v547, %v634
    %v636 = vrot.slane %v635, 2
    %v637 = vadd.f32 %v635, %v636
    %v638 = vrot.slane %v637, 1
    %v639 = vadd.f32 %v637, %v638
    %v640 = vrot.slane %v549, 4
    %v641 = vadd.f32 %v549, %v640
    %v642 = vrot.slane %v641, 2
    %v643 = vadd.f32 %v641, %v642
    %v644 = vrot.slane %v643, 1
    %v645 = vadd.f32 %v643, %v644
    %v646 = vrcp.pop %v555
    %v647 = vrcp.pop %v561
    %v648 = vrcp.pop %v567
    %v649 = vrcp.pop %v573
    %v650 = vrcp.pop %v579
    %v651 = vrcp.pop %v585
    %v652 = vrcp.pop %v591
    %v653 = vrcp.pop %v597
    %v654 = vrcp.pop %v603
    %v655 = vrcp.pop %v609
    %v656 = vrcp.pop %v615
    %v657 = vrcp.pop %v621
    %v658 = vrcp.pop %v627
    %v659 = vrcp.pop %v633
    %v660 = vrcp.pop %v639
    %v661 = vrcp.pop %v645
    %v662 = vmul.f32 %v555, %v646
    %v663 = vmul.f32 %v561, %v647
    %v664 = vmul.f32 %v567, %v648
    %v665 = vmul.f32 %v573, %v649
    %v666 = vmul.f32 %v579, %v650
    %v667 = vmul.f32 %v585, %v651
    %v668 = vmul.f32 %v591, %v652
    %v669 = vmul.f32 %v597, %v653
    %v670 = vmul.f32 %v603, %v654
    %v671 = vmul.f32 %v609, %v655
    %v672 = vmul.f32 %v615, %v656
    %v673 = vmul.f32 %v621, %v657
    %v674 = vmul.f32 %v627, %v658
    %v675 = vmul.f32 %v633, %v659
    %v676 = vmul.f32 %v639, %v660
    %v677 = vmul.f32 %v645, %v661
    %v678 = vsub.f32 2.0, %v662
    %v679 = vsub.f32 2.0, %v663
    %v680 = vsub.f32 2.0, %v664
    %v681 = vsub.f32 2.0, %v665
    %v682 = vsub.f32 2.0, %v666
    %v683 = vsub.f32 2.0, %v667
    %v684 = vsub.f32 2.0, %v668
    %v685 = vsub.f32 2.0, %v669
    %v686 = vsub.f32 2.0, %v670
    %v687 = vsub.f32 2.0, %v671
    %v688 = vsub.f32 2.0, %v672
    %v689 = vsub.f32 2.0, %v673
    %v690 = vsub.f32 2.0, %v674
    %v691 = vsub.f32 2.0, %v675
    %v692 = vsub.f32 2.0, %v676
    %v693 = vsub.f32 2.0, %v677
    %v694 = vmul.f32 %v646, %v678
    %v695 = vmul.f32 %v647, %v679
    %v696 = vmul.f32 %v648, %v680
    %v697 = vmul.f32 %v649, %v681
    %v698 = vmul.f32 %v650, %v682
    %v699 = vmul.f32 %v651, %v683
    %v700 = vmul.f32 %v652, %v684
    %v701 = vmul.f32 %v653, %v685
    %v702 = vmul.f32 %v654, %v686
    %v703 = vmul.f32 %v655, %v687
    %v704 = vmul.f32 %v656, %v688
    %v705 = vmul.f32 %v657, %v689
    %v706 = vmul.f32 %v658, %v690
    %v707 = vmul.f32 %v659, %v691
    %v708 = vmul.f32 %v660, %v692
    %v709 = vmul.f32 %v661, %v693
    %v710 = vmul.f32 %v519, %v694
    %v711 = vmul.f32 %v521, %v695
    %v712 = vmul.f32 %v523, %v696
    %v713 = vmul.f32 %v525, %v697
    %v714 = vmul.f32 %v527, %v698
    %v715 = vmul.f32 %v529, %v699
    %v716 = vmul.f32 %v531, %v700
    %v717 = vmul.f32 %v533, %v701
    %v718 = vmul.f32 %v535, %v702
    %v719 = vmul.f32 %v537, %v703
    %v720 = vmul.f32 %v539, %v704
    %v721 = vmul.f32 %v541, %v705
    %v722 = vmul.f32 %v543, %v706
    %v723 = vmul.f32 %v545, %v707
    %v724 = vmul.f32 %v547, %v708
    %v725 = vmul.f32 %v549, %v709
    %v726 = vmul.f32 %v710, %v22
    %v727 = vmul.f32 %v711, %v23
    %v728 = vmul.f32 %v712, %v24
    %v729 = vmul.f32 %v713, %v25
    %v730 = vmul.f32 %v714, %v26
    %v731 = vmul.f32 %v715, %v27
    %v732 = vmul.f32 %v716, %v28
    %v733 = vmul.f32 %v717, %v29
    %v734 = vmul.f32 %v718, %v30
    %v735 = vmul.f32 %v719, %v31
    %v736 = vmul.f32 %v720, %v32
    %v737 = vmul.f32 %v721, %v33
    %v738 = vmul.f32 %v722, %v34
    %v739 = vmul.f32 %v723, %v35
    %v740 = vmul.f32 %v724, %v36
    %v741 = vmul.f32 %v725, %v37
    %v742 = vrot.slane %v726, 4
    %v743 = vadd.f32 %v726, %v742
    %v744 = vrot.slane %v743, 2
    %v745 = vadd.f32 %v743, %v744
    %v746 = vrot.slane %v745, 1
    %v747 = vadd.f32 %v745, %v746
    %v748 = vrot.slane %v727, 4
    %v749 = vadd.f32 %v727, %v748
    %v750 = vrot.slane %v749, 2
    %v751 = vadd.f32 %v749, %v750
    %v752 = vrot.slane %v751, 1
    %v753 = vadd.f32 %v751, %v752
    %v754 = vrot.slane %v728, 4
    %v755 = vadd.f32 %v728, %v754
    %v756 = vrot.slane %v755, 2
    %v757 = vadd.f32 %v755, %v756
    %v758 = vrot.slane %v757, 1
    %v759 = vadd.f32 %v757, %v758
    %v760 = vrot.slane %v729, 4
    %v761 = vadd.f32 %v729, %v760
    %v762 = vrot.slane %v761, 2
    %v763 = vadd.f32 %v761, %v762
    %v764 = vrot.slane %v763, 1
    %v765 = vadd.f32 %v763, %v764
    %v766 = vrot.slane %v730, 4
    %v767 = vadd.f32 %v730, %v766
    %v768 = vrot.slane %v767, 2
    %v769 = vadd.f32 %v767, %v768
    %v770 = vrot.slane %v769, 1
    %v771 = vadd.f32 %v769, %v770
    %v772 = vrot.slane %v731, 4
    %v773 = vadd.f32 %v731, %v772
    %v774 = vrot.slane %v773, 2
    %v775 = vadd.f32 %v773, %v774
    %v776 = vrot.slane %v775, 1
    %v777 = vadd.f32 %v775, %v776
    %v778 = vrot.slane %v732, 4
    %v779 = vadd.f32 %v732, %v778
    %v780 = vrot.slane %v779, 2
    %v781 = vadd.f32 %v779, %v780
    %v782 = vrot.slane %v781, 1
    %v783 = vadd.f32 %v781, %v782
    %v784 = vrot.slane %v733, 4
    %v785 = vadd.f32 %v733, %v784
    %v786 = vrot.slane %v785, 2
    %v787 = vadd.f32 %v785, %v786
    %v788 = vrot.slane %v787, 1
    %v789 = vadd.f32 %v787, %v788
    %v790 = vrot.slane %v734, 4
    %v791 = vadd.f32 %v734, %v790
    %v792 = vrot.slane %v791, 2
    %v793 = vadd.f32 %v791, %v792
    %v794 = vrot.slane %v793, 1
    %v795 = vadd.f32 %v793, %v794
    %v796 = vrot.slane %v735, 4
    %v797 = vadd.f32 %v735, %v796
    %v798 = vrot.slane %v797, 2
    %v799 = vadd.f32 %v797, %v798
    %v800 = vrot.slane %v799, 1
    %v801 = vadd.f32 %v799, %v800
    %v802 = vrot.slane %v736, 4
    %v803 = vadd.f32 %v736, %v802
    %v804 = vrot.slane %v803, 2
    %v805 = vadd.f32 %v803, %v804
    %v806 = vrot.slane %v805, 1
    %v807 = vadd.f32 %v805, %v806
    %v808 = vrot.slane %v737, 4
    %v809 = vadd.f32 %v737, %v808
    %v810 = vrot.slane %v809, 2
    %v811 = vadd.f32 %v809, %v810
    %v812 = vrot.slane %v811, 1
    %v813 = vadd.f32 %v811, %v812
    %v814 = vrot.slane %v738, 4
    %v815 = vadd.f32 %v738, %v814
    %v816 = vrot.slane %v815, 2
    %v817 = vadd.f32 %v815, %v816
    %v818 = vrot.slane %v817, 1
    %v819 = vadd.f32 %v817, %v818
    %v820 = vrot.slane %v739, 4
    %v821 = vadd.f32 %v739, %v820
    %v822 = vrot.slane %v821, 2
    %v823 = vadd.f32 %v821, %v822
    %v824 = vrot.slane %v823, 1
    %v825 = vadd.f32 %v823, %v824
    %v826 = vrot.slane %v740, 4
    %v827 = vadd.f32 %v740, %v826
    %v828 = vrot.slane %v827, 2
    %v829 = vadd.f32 %v827, %v828
    %v830 = vrot.slane %v829, 1
    %v831 = vadd.f32 %v829, %v830
    %v832 = vrot.slane %v741, 4
    %v833 = vadd.f32 %v741, %v832
    %v834 = vrot.slane %v833, 2
    %v835 = vadd.f32 %v833, %v834
    %v836 = vrot.slane %v835, 1
    %v837 = vadd.f32 %v835, %v836
    %vm854 = vcmask 1041409
    %v855 = vsel %vm854, %v753, %v747
    %vm856 = vcmask 1042434
    %v857 = vsel %vm856, %v759, %v855
    %vm858 = vcmask 1043459
    %v859 = vsel %vm858, %v765, %v857
    %vm860 = vcmask 1044484
    %v861 = vsel %vm860, %v771, %v859
    %vm862 = vcmask 1045509
    %v863 = vsel %vm862, %v777, %v861
    %vm864 = vcmask 1046534
    %v865 = vsel %vm864, %v783, %v863
    %vm866 = vcmask 1047559
    %v867 = vsel %vm866, %v789, %v865
    %v868 = vsel %vm854, %v801, %v795
    %v869 = vsel %vm856, %v807, %v868
    %v870 = vsel %vm858, %v813, %v869
    %v871 = vsel %vm860, %v819, %v870
    %v872 = vsel %vm862, %v825, %v871
    %v873 = vsel %vm864, %v831, %v872
    %v874 = vsel %vm866, %v837, %v873
    %877 = vst [vmem:[#allocation2] sm:$0xff] %v867
    %878 = vst [vmem:[#allocation2 + $0x8] sm:$0xff] %v874
    // Predicated region
    $region22: #{center_intersection.1} parent=1 // pred_check
      _
    $region23: #{center_intersection.1} parent=1 // pred_check_branch
      %880 = sbr.rel (0) target = $region25
    $region24: #{center_intersection.1} parent=1 // pred_region
      %s882 = ssub.s32 256, 256
      %883 = vsyncadd [#allocation3], %s882
      %s884 = sshll.u32 [#allocation2], 4
      %s885 = int_to_ptr.vmem [resolvable:$true] %s884
      %890 = dma.vmem_to_hbm [thread:$0]  %s885, 256, %s5, [#allocation3], 128, 128, 8
    $region25: #{center_intersection.1} parent=1 // pred_fallthru
      _
    // Predicated region
    $region26: #{center_intersection.1} parent=1 // pred_check
      _
    $region27: #{center_intersection.1} parent=1 // pred_check_branch
      %892 = sbr.rel (0) target = $region29
    $region28: #{center_intersection.1} parent=1 // pred_region
      %893 = dma.done [#allocation3], 256
    $region29: #{center_intersection.1} parent=1 // pred_fallthru
      _
    %894 = vsyncpa [#allocation3], 1

</llo_original>
